<compile_context>
chip_gen: v5e
topology: v5e:2x2
jax: 0.10.0
libtpu: 0.0.40
codegen_flags: <defaults>
</compile_context>

<pallas_src>
from functools import lru_cache, partial

import numpy as np
import jax
import jax.numpy as jnp
from jax.experimental import pallas as pl
from jax.experimental.pallas import tpu as pltpu


def _round_up(a: int, b: int) -> int:
    return (a + b - 1) // b * b


# ---------------------------------------------------------------------------
# Deterministic parameter construction (mirrors create_fourier_kernels with
# freq_scale='no', win_length=n_fft).
# ---------------------------------------------------------------------------
def make_fourier_kernels(n_fft: int, freq_bins=None, window: str = "hann"):
    if freq_bins is None:
        freq_bins = n_fft // 2 + 1
    s = np.arange(0, n_fft, 1.0)
    if window == "hann":
        # scipy.signal.get_window('hann', n_fft, fftbins=True) == periodic hann
        window_mask = 0.5 - 0.5 * np.cos(2.0 * np.pi * np.arange(n_fft) / n_fft)
    elif window == "ones":
        window_mask = np.ones(n_fft)
    else:
        raise ValueError("only 'hann' / 'ones' windows implemented in-script")

    wsin = np.empty((freq_bins, n_fft), dtype=np.float64)
    wcos = np.empty((freq_bins, n_fft), dtype=np.float64)
    for k in range(freq_bins):  # freq_scale == 'no'
        wsin[k, :] = window_mask * np.sin(2 * np.pi * k * s / n_fft)
        wcos[k, :] = window_mask * np.cos(2 * np.pi * k * s / n_fft)
    return wsin.astype(np.float32), wcos.astype(np.float32)


@lru_cache(maxsize=None)
def _get_fused_weights(n_fft: int, freq_bins: int, window: str):
    """Fused, lane-padded STFT weight matrix: (n_fft, Fpad) with
    columns [wcos^T | -wsin^T | zero padding], Fpad = round_up(2F, 128)."""
    wsin_np, wcos_np = make_fourier_kernels(n_fft, freq_bins=freq_bins, window=window)
    w = np.concatenate([wcos_np.T, -wsin_np.T], axis=1)         # (N, 2F)
    f_pad = _round_up(2 * freq_bins, 128)
    w_padded = np.zeros((n_fft, f_pad), dtype=np.float32)
    w_padded[:, : 2 * freq_bins] = w
    return jnp.asarray(w_padded)                                 # cached device array


# ---------------------------------------------------------------------------
# Pallas kernel: one fused, lane-dense MXU matmul per (column-tile, row-tile).
#   frames_ref : (row_tile, n_fft)     w_ref : (n_fft, col_tile)
#   out_ref    : (row_tile, col_tile)
# Columns [0:F) of the full output = spec_real, [F:2F) = -spec_imag
# (sign baked into the weights).
# ---------------------------------------------------------------------------
def _stft_matmul_kernel(frames_ref, w_ref, out_ref):
    out_ref[...] = jnp.dot(frames_ref[...], w_ref[...],
                           preferred_element_type=jnp.float32)


def _pick_col_tile(n_fft: int, f_pad: int, budget: int = 8 * 1024 * 1024) -> int:
    """Largest 128-multiple column tile dividing f_pad whose double-buffered
    weight block (n_fft * ct * 4 B * 2) fits the VMEM budget."""
    for ct in (1024, 512, 256, 128):
        if f_pad % ct == 0 and n_fft * ct * 8 <= budget:
            return ct
    return 128


def _pick_row_tile(rows: int, n_fft: int, budget: int = 8 * 1024 * 1024) -> int:
    """Sublane-aligned row tile; double-buffered frame block stays in budget."""
    cap = max(8, min(256, (budget // (n_fft * 8)) // 8 * 8))
    return min(cap, _round_up(rows, 8))


@partial(jax.jit,
         static_argnames=("n_fft", "hop_length", "freq_bins", "center", "pad_mode"))
def _stft_forward_impl(x, w_padded, *, n_fft, hop_length, freq_bins, center, pad_mode):
    pad_amount = n_fft // 2
    if center:
        if pad_mode == "reflect":
            x = jnp.pad(x, ((0, 0), (0, 0), (pad_amount, pad_amount)), mode="reflect")
        elif pad_mode == "constant":
            x = jnp.pad(x, ((0, 0), (0, 0), (pad_amount, pad_amount)), mode="constant")
        else:
            raise ValueError("pad_mode must be 'reflect' or 'constant'")

    B = x.shape[0]
    L = x.shape[-1]
    T = (L - n_fft) // hop_length + 1      # conv1d 'valid' output length with stride
    F = freq_bins
    N = n_fft
    f_pad = w_padded.shape[1]

    xs = x[:, 0, :].astype(jnp.float32)

    # --- glue: gather-free framing -> (B, T, n_fft) ---
    if n_fft % hop_length == 0:
        # Reshape into hop-sized chunks, then concat R shifted slices.
        R = n_fft // hop_length
        chunks = xs[:, : (T + R - 1) * hop_length].reshape(B, T + R - 1, hop_length)
        frames = jnp.concatenate([chunks[:, j:j + T, :] for j in range(R)], axis=-1)
    else:
        # Fallback (hop does not divide n_fft): index gather. Correct but slower.
        frame_idx = (jnp.arange(T)[:, None] * hop_length + jnp.arange(n_fft)[None, :])
        frames = xs[:, frame_idx]

    # --- flatten (B, T) into rows, pad to a sublane-friendly row tile ---
    rows = B * T
    row_tile = _pick_row_tile(rows, N)
    rows_padded = _round_up(rows, row_tile)
    col_tile = _pick_col_tile(N, f_pad)

    frames_flat = frames.reshape(rows, N)
    if rows_padded != rows:
        frames_flat = jnp.pad(frames_flat, ((0, rows_padded - rows), (0, 0)))

    # Column tiles OUTER (weight tile resident across the inner row sweep),
    # row tiles INNER.
    grid = (f_pad // col_tile, rows_padded // row_tile)

    out = pl.pallas_call(
        _stft_matmul_kernel,
        out_shape=jax.ShapeDtypeStruct((rows_padded, f_pad), jnp.float32),
        grid_spec=pltpu.PrefetchScalarGridSpec(
            num_scalar_prefetch=0,
            grid=grid,
            in_specs=[
                pl.BlockSpec((row_tile, N), lambda j, i: (i, 0)),
                pl.BlockSpec((N, col_tile), lambda j, i: (0, j)),  # invariant in i
            ],
            out_specs=pl.BlockSpec((row_tile, col_tile), lambda j, i: (i, j)),
        ),
        compiler_params=pltpu.CompilerParams(
            dimension_semantics=("parallel", "parallel")),
        cost_estimate=pl.CostEstimate(
            flops=2 * rows_padded * N * f_pad,
            transcendentals=0,
            bytes_accessed=4 * (rows_padded * N * (f_pad // col_tile)
                                + N * f_pad
                                + rows_padded * f_pad)),
    )(frames_flat, w_padded)

    # --- glue: strip padding, restore PyTorch (B, F, T, 2) layout ---
    spec_real = out[:rows, :F].reshape(B, T, F)
    spec_neg_imag = out[:rows, F:2 * F].reshape(B, T, F)
    return jnp.stack((jnp.transpose(spec_real, (0, 2, 1)),
                      jnp.transpose(spec_neg_imag, (0, 2, 1))), axis=-1)


def stft_forward(x, *, n_fft=64, hop_length=None, freq_bins=None,
                 center=True, pad_mode="reflect", window="hann",
                 output_format="Complex"):
    """Forward STFT. 'Complex' returns (B, freq_bins, T, 2) f32 (default),
    'Magnitude' -> (B, freq_bins, T), 'Phase' -> (B, freq_bins, T, 2) atan2."""
    if hop_length is None:
        hop_length = n_fft // 4
    if freq_bins is None:
        freq_bins = n_fft // 2 + 1

    # broadcast_dim
    if x.ndim == 1:
        x = x[None, None, :]
    elif x.ndim == 2:
        x = x[:, None, :]
    elif x.ndim != 3:
        raise ValueError("Only support input with shape (len,), (batch, len), (batch,1,len)")

    w_padded = _get_fused_weights(n_fft, freq_bins, window)   # built once, cached
    cplx = _stft_forward_impl(x, w_padded, n_fft=n_fft, hop_length=hop_length,
                              freq_bins=freq_bins, center=center, pad_mode=pad_mode)
    if output_format == "Complex":
        return cplx
    if output_format == "Magnitude":
        # cplx[..., 0] = real, cplx[..., 1] = -imag
        return jnp.sqrt(cplx[..., 0] ** 2 + cplx[..., 1] ** 2 + 1e-8)
    if output_format == "Phase":
        return jnp.arctan2(cplx[..., 1], cplx[..., 0])
    raise ValueError("output_format must be 'Complex', 'Magnitude', or 'Phase'")


if __name__ == "__main__":
    # Small, module-consistent shapes: batch=2, audio length=256, n_fft=64, hop=16.
    n_fft = 64
    hop = 16
    B, L = 2, 256

    key = jax.random.PRNGKey(0)
    x = jax.random.normal(key, (B, L), dtype=jnp.float32)

    out = stft_forward(x, n_fft=n_fft, hop_length=hop)
    out = jax.block_until_ready(out)

    # Sanity-check against a plain-JAX reference of the same math.
    pad = n_fft // 2
    xp = jnp.pad(x, ((0, 0), (pad, pad)), mode="reflect")
    T = (xp.shape[-1] - n_fft) // hop + 1
    idx = jnp.arange(T)[:, None] * hop + jnp.arange(n_fft)[None, :]
    frames = xp[:, idx]
    wsin_np, wcos_np = make_fourier_kernels(n_fft)
    ref_real = jnp.einsum("btn,fn->bft", frames, jnp.asarray(wcos_np))
    ref_imag = jnp.einsum("btn,fn->bft", frames, jnp.asarray(wsin_np))
    ref = jnp.stack((ref_real, -ref_imag), axis=-1)

    assert out.shape == (B, n_fft // 2 + 1, T, 2), out.shape
    max_err = float(jnp.max(jnp.abs(out - ref)))
    assert max_err < 1e-3, f"mismatch vs reference: {max_err}"

    print("KERNEL_OK")
</pallas_src>

<mosaic_0001>
module attributes {stable_mosaic.version = 11 : i64} {
  func.func @_stft_matmul_kernel(%arg0: i32, %arg1: i32, %arg2: memref<40x64xf32, #tpu.memory_space<vmem>>, %arg3: memref<64x128xf32, #tpu.memory_space<vmem>>, %arg4: memref<40x128xf32, #tpu.memory_space<vmem>>) attributes {dimension_semantics = [#tpu.dimension_semantics<parallel>, #tpu.dimension_semantics<parallel>], iteration_bounds = array<i64: 1, 1>, scalar_prefetch = 0 : i64, scratch_operands = 0 : i64, tpu.core_type = #tpu.core_type<tc>, window_params = [{transform_indices = @transform_0, window_bounds = array<i64: 40, 64>}, {transform_indices = @transform_1, window_bounds = array<i64: 64, 128>}, {transform_indices = @transform_2, window_bounds = array<i64: 40, 128>}]} {
    %c0 = arith.constant 0 : index
    %c0_0 = arith.constant 0 : index
    %0 = vector.load %arg2[%c0, %c0_0] : memref<40x64xf32, #tpu.memory_space<vmem>>, vector<40x64xf32>
    %c0_1 = arith.constant 0 : index
    %c0_2 = arith.constant 0 : index
    %1 = vector.load %arg3[%c0_1, %c0_2] : memref<64x128xf32, #tpu.memory_space<vmem>>, vector<64x128xf32>
    %cst = arith.constant dense<0.000000e+00> : vector<40x128xf32>
    %2 = tpu.matmul %0, %1, %cst {dimension_numbers = #tpu.dot_dimension_numbers<[1], [0], [0], [1], [0, 0, 1, 1], [], []>} : vector<40x64xf32>, vector<64x128xf32>, vector<40x128xf32> -> vector<40x128xf32>
    %c0_3 = arith.constant 0 : index
    %c0_4 = arith.constant 0 : index
    %3 = vector.load %arg4[%c0_3, %c0_4] : memref<40x128xf32, #tpu.memory_space<vmem>>, vector<40x128xf32>
    tpu.vector_store %arg4[%c0_3, %c0_4], %2 {strides = array<i32>} : memref<40x128xf32, #tpu.memory_space<vmem>>, vector<40x128xf32>,
    return
  }
  func.func @transform_0(%arg0: i32, %arg1: i32) -> (i32, i32) {
    %c0_i32 = arith.constant 0 : i32
    %c0_i32_0 = arith.constant 0 : i32
    return %arg1, %c0_i32 : i32, i32
  }
  func.func @transform_1(%arg0: i32, %arg1: i32) -> (i32, i32) {
    %c0_i32 = arith.constant 0 : i32
    %c0_i32_0 = arith.constant 0 : i32
    return %c0_i32, %arg0 : i32, i32
  }
  func.func @transform_2(%arg0: i32, %arg1: i32) -> (i32, i32) {
    %c0_i32 = arith.constant 0 : i32
    return %arg1, %arg0 : i32, i32
  }
}

</mosaic_0001>

<llo_original>
// kernel: squeeze.1
$region0: #{squeeze.1}
  %s0 = inlined_call_operand.vmem [shape: f32[2,320], index: 0, kind: input, shape index: {}]
  %s1 = inlined_call_operand.vmem [shape: f32[2,20,16], index: 1, kind: output, shape index: {}]
  $region1: #{squeeze.1} parent=0
    #allocation0 [shape = 'u8[12288]{0}', space=vmem, size = 0x3000, scoped, tag = 'scoped mem for input reshape']
    %s3 = ssub.s32 4, 1
    %s4 = scalar_lea.vmem %s0, 4
    %v5 = vld [vmem:[%s4] sm:%s3]
    %s6 = scalar_lea.vmem [#allocation0], 16
    %7 = vst [vmem:[%s6] sm:%s3] %v5
    %s8 = scalar_lea.vmem %s0, 2
    %v9 = vld [vmem:[%s8] sm:%s3]
    %s10 = scalar_lea.vmem [#allocation0], 8
    %11 = vst [vmem:[%s10] sm:%s3] %v9
    %v12 = vld [vmem:[%s0] sm:%s3]
    %13 = vst [vmem:[#allocation0] sm:%s3] %v12
    %v14 = vld [vmem:[#allocation0] sm:$0x3]
    %vm15 = vcmask 130048
    %16 = vst.msk [vmem:[%s1] ss:$24 sm:$0x3] %vm15, %v14
    %s17 = scalar_lea.vmem [#allocation0], 8
    %v18 = vld [vmem:[%s17] sm:$0x3]
    %vm19 = vcmask 130048
    %s20 = scalar_lea.vmem %s1, 8
    %21 = vst.msk [vmem:[%s20] ss:$24 sm:$0x3] %vm19, %v18
    %s22 = scalar_lea.vmem [#allocation0], 16
    %v23 = vld [vmem:[%s22] sm:$0x3]
    %vm24 = vcmask 130048
    %s25 = scalar_lea.vmem %s1, 16
    %26 = vst.msk [vmem:[%s25] ss:$24 sm:$0x3] %vm24, %v23
    %v27 = vld [vmem:[#allocation0] ss:$8 sm:$0x7]
    %s28 = scalar_lea.vmem [#allocation0], 4294967273
    %v29 = vld [vmem:[%s28] ss:$8 sm:$0x38]
    %vm30 = vcmask 1045507
    %v31 = vsel %vm30, %v29, %v27
    %32 = vrot.lane.b32.xlu0 %v31, 112
    %v33 = vpop.permute.xlu0 %32
    %vm34 = vcmask 130048
    %s35 = scalar_lea.vmem %s1, 1
    %36 = vst.msk [vmem:[%s35] ss:$8 sm:$0xf] %vm34, %v33
    %s37 = scalar_lea.vmem %s1, 1
    %38 = vst.msk [vmem:[%s37] ss:$8 sm:$0x30] %vm34, %v33
    %v39 = vld [vmem:[#allocation0] ss:$8 sm:$0x7]
    %s40 = scalar_lea.vmem [#allocation0], 4294967273
    %v41 = vld [vmem:[%s40] ss:$8 sm:$0x38]
    %vm42 = vcmask 1045507
    %v43 = vsel %vm42, %v41, %v39
    %44 = vrot.lane.b32.xlu0 %v43, 96
    %v45 = vpop.permute.xlu0 %44
    %vm46 = vcmask 130048
    %s47 = scalar_lea.vmem %s1, 2
    %48 = vst.msk [vmem:[%s47] ss:$8 sm:$0xf] %vm46, %v45
    %s49 = scalar_lea.vmem %s1, 2
    %50 = vst.msk [vmem:[%s49] ss:$8 sm:$0x30] %vm46, %v45
    %v51 = vld [vmem:[#allocation0] ss:$8 sm:$0x7]
    %s52 = scalar_lea.vmem [#allocation0], 4294967273
    %v53 = vld [vmem:[%s52] ss:$8 sm:$0x38]
    %vm54 = vcmask 1045507
    %v55 = vsel %vm54, %v53, %v51
    %56 = vrot.lane.b32.xlu0 %v55, 80
    %v57 = vpop.permute.xlu0 %56
    %vm58 = vcmask 130048
    %s59 = scalar_lea.vmem %s1, 3
    %60 = vst.msk [vmem:[%s59] ss:$8 sm:$0xf] %vm58, %v57
    %s61 = scalar_lea.vmem %s1, 3
    %62 = vst.msk [vmem:[%s61] ss:$8 sm:$0x30] %vm58, %v57
    %v63 = vld.sshfl [vmem:[#allocation0] sm:$0xff pattern:$0x99999180]
    %64 = vrot.lane.b32.xlu0 %v63, 64
    %v65 = vpop.permute.xlu0 %64
    %vm66 = vcmask 130048
    %s67 = scalar_lea.vmem %s1, 4
    %68 = vst.msk [vmem:[%s67] ss:$8 sm:$0x3] %vm66, %v65
    %s69 = scalar_lea.vmem %s1, 12
    %70 = vst.msk [vmem:[%s69] ss:$8 sm:$0xc] %vm66, %v65
    %v71 = vld.sshfl [vmem:[#allocation0] sm:$0xff pattern:$0x99999180]
    %72 = vrot.lane.b32.xlu0 %v71, 48
    %v73 = vpop.permute.xlu0 %72
    %vm74 = vcmask 130048
    %s75 = scalar_lea.vmem %s1, 5
    %76 = vst.msk [vmem:[%s75] ss:$8 sm:$0x3] %vm74, %v73
    %s77 = scalar_lea.vmem %s1, 13
    %78 = vst.msk [vmem:[%s77] ss:$8 sm:$0xc] %vm74, %v73
    %v79 = vld.sshfl [vmem:[#allocation0] sm:$0xff pattern:$0x99999180]
    %80 = vrot.lane.b32.xlu0 %v79, 32
    %v81 = vpop.permute.xlu0 %80
    %vm82 = vcmask 130048
    %s83 = scalar_lea.vmem %s1, 6
    %84 = vst.msk [vmem:[%s83] ss:$8 sm:$0x3] %vm82, %v81
    %s85 = scalar_lea.vmem %s1, 14
    %86 = vst.msk [vmem:[%s85] ss:$8 sm:$0xc] %vm82, %v81
    %v87 = vld.sshfl [vmem:[#allocation0] sm:$0xff pattern:$0x99999180]
    %88 = vrot.lane.b32.xlu0 %v87, 16
    %v89 = vpop.permute.xlu0 %88
    %vm90 = vcmask 130048
    %s91 = scalar_lea.vmem %s1, 7
    %92 = vst.msk [vmem:[%s91] ss:$8 sm:$0x3] %vm90, %v89
    %s93 = scalar_lea.vmem %s1, 15
    %94 = vst.msk [vmem:[%s93] ss:$8 sm:$0xc] %vm90, %v89

// kernel: _stft_forward_impl.1
$region0: #{_stft_forward_impl.1}
  #allocation0 [shape = 'u32[]', space=smem, size = 0x4, offset = 0x4, fixed_abs, tag = 'smem constant byte address 0x4 - core index']
  #allocation1 [shape = 'u32[72,128]{1,0:T(1,128)}', space=vmem, size = 0x9000, scoped, tag = 'internal scratch']
  %s0 = inlined_call_operand.vmem [shape: f32[40,64], index: 0, kind: input, shape index: {}]
  %s1 = inlined_call_operand.vmem [shape: f32[64,128], index: 1, kind: input, shape index: {}]
  %s2 = inlined_call_operand.vmem [shape: f32[40,128], index: 2, kind: output, shape index: {}]
  %s3 = sld [smem:[#allocation0]]
  $region18: #{_stft_forward_impl.1} parent=0
    _
  %s5 = ssub.s32 1, %s3
  %s6 = scalar_select 0, %s5, %s3
  // Predicated region
  $region2: #{_stft_forward_impl.1} parent=0 // pred_check
    _
  $region3: #{_stft_forward_impl.1} parent=0 // pred_check_branch
    %8 = sbr.rel (0) target = $region5
  $region4: #{_stft_forward_impl.1} parent=0 // pred_region
    _
  $region5: #{_stft_forward_impl.1} parent=0 // pred_fallthru
    _
  // Predicated region
  $region6: #{_stft_forward_impl.1} parent=0 // pred_check
    _
  $region7: #{_stft_forward_impl.1} parent=0 // pred_check_branch
    %10 = sbr.rel (0) target = $region9
  $region8: #{_stft_forward_impl.1} parent=0 // pred_region
    _
  $region9: #{_stft_forward_impl.1} parent=0 // pred_fallthru
    _
  %v11 = vld [vmem:[%s0] sm:$0xff]
  %v12 = vld [vmem:[%s0 + $0x8] sm:$0xff]
  %v13 = vld [vmem:[%s0 + $0x10] sm:$0xff]
  %v14 = vld [vmem:[%s0 + $0x18] sm:$0xff]
  %v15 = vld [vmem:[%s0 + $0x20] sm:$0xff]
  %v16 = vld [vmem:[%s1] sm:$0xff]
  %v17 = vld [vmem:[%s1 + $0x8] sm:$0xff]
  %v18 = vld [vmem:[%s1 + $0x10] sm:$0xff]
  %v19 = vld [vmem:[%s1 + $0x18] sm:$0xff]
  %v20 = vld [vmem:[%s1 + $0x20] sm:$0xff]
  %v21 = vld [vmem:[%s1 + $0x28] sm:$0xff]
  %v22 = vld [vmem:[%s1 + $0x30] sm:$0xff]
  %v23 = vld [vmem:[%s1 + $0x38] sm:$0xff]
  %vm24 = vcmask 523264
  %v26 = vsel %vm24, %v11, 0
  %v29 = vsel %vm24, %v12, 0
  %v32 = vsel %vm24, %v13, 0
  %v35 = vsel %vm24, %v14, 0
  %v38 = vsel %vm24, %v15, 0
  %40 = vmatpush.msra.mxu0 0.0
  %41 = vmatpush.msra.mxu0 0.0
  %42 = vmatpush.msra.mxu0 0.0
  %43 = vmatpush.msra.mxu0 0.0
  %44 = vmatpush.msra.mxu0 0.0
  %45 = vmatpush.msra.mxu0 0.0
  %46 = vmatpush.msra.mxu0 0.0
  %47 = vmatpush.msra.mxu0 0.0
  %48 = vmatpush.msra.mxu0 %v23
  %49 = vmatpush.msra.mxu0 %v22
  %50 = vmatpush.msra.mxu0 %v21
  %51 = vmatpush.msra.mxu0 %v20
  %52 = vmatpush.msra.mxu0 %v19
  %53 = vmatpush.msra.mxu0 %v18
  %54 = vmatpush.msra.mxu0 %v17
  %55 = vmatpush.msra.mxu0 %v16
  %56 = vmatmul.f32.gmra.mxu0 %v26
  %v57 = vpop.f32.mrf.mxu0
  %v58 = vadd.f32 0.0, %v57
  %59 = vmatmul.f32.gmra.mxu0 %v29
  %v60 = vpop.f32.mrf.mxu0
  %v61 = vadd.f32 0.0, %v60
  %62 = vmatmul.f32.gmra.mxu0 %v32
  %v63 = vpop.f32.mrf.mxu0
  %v64 = vadd.f32 0.0, %v63
  %65 = vmatmul.f32.gmra.mxu0 %v35
  %v66 = vpop.f32.mrf.mxu0
  %v67 = vadd.f32 0.0, %v66
  %68 = vmatmul.f32.gmra.mxu0 %v38
  %v69 = vpop.f32.mrf.mxu0
  %v70 = vadd.f32 0.0, %v69
  %71 = vdwg.mxu0
  %72 = vst [vmem:[%s2] sm:$0xff] %v58
  %73 = vst [vmem:[%s2 + $0x8] sm:$0xff] %v61
  %74 = vst [vmem:[%s2 + $0x10] sm:$0xff] %v64
  %75 = vst [vmem:[%s2 + $0x18] sm:$0xff] %v67
  %76 = vst [vmem:[%s2 + $0x20] sm:$0xff] %v70
  // Predicated region
  $region10: #{_stft_forward_impl.1} parent=0 // pred_check
    _
  $region11: #{_stft_forward_impl.1} parent=0 // pred_check_branch
    %78 = sbr.rel (0) target = $region13
  $region12: #{_stft_forward_impl.1} parent=0 // pred_region
    _
  $region13: #{_stft_forward_impl.1} parent=0 // pred_fallthru
    _
  // Predicated region
  $region14: #{_stft_forward_impl.1} parent=0 // pred_check
    _
  $region15: #{_stft_forward_impl.1} parent=0 // pred_check_branch
    %80 = sbr.rel (0) target = $region17
  $region16: #{_stft_forward_impl.1} parent=0 // pred_region
    _
  $region17: #{_stft_forward_impl.1} parent=0 // pred_fallthru
    _

</llo_original>
